<compile_context>
chip_gen: v7x
topology: tpu7x:2x2x1
jax: 0.10.0
libtpu: 0.0.40
codegen_flags: <defaults>
</compile_context>

<pallas_src>
import functools

import jax
import jax.numpy as jnp
import numpy as np
from jax.experimental import pallas as pl
from jax.experimental.pallas import tpu as pltpu


def _round_up(x, m):
    return (x + m - 1) // m * m


def _default_chunk_bytes():
    # Per-generation DMA chunk target to amortize the ~0.35us per-grid-step
    # overhead (review: v5e ~2-4 MiB, v6e ~4-6 MiB, v7x ~6-8 MiB).
    try:
        kind = jax.devices()[0].device_kind.lower()
    except Exception:
        return 4 << 20
    if "v7" in kind:
        return 7 << 20
    if "v6" in kind:
        return 5 << 20
    if "v5 lite" in kind or "v5e" in kind or "v5lite" in kind:
        return 3 << 20
    return 4 << 20


def mixpool_cls_kernel(alpha_ref, x_ref, w_ref, b_ref, o_ref,
                       sum_acc, max_acc, *, hw_true, n_chunks):
    """One (B-tile, HW-chunk) grid step.

    alpha_ref: SMEM (1,) f32
    x_ref:     VMEM (tb, C, thw)   native-dtype chunk of x
    w_ref:     VMEM (C, Npad)      fc weight^T, native dtype, lane padded
    b_ref:     VMEM (1, Npad)      fc bias, native dtype, lane padded
    o_ref:     VMEM (1, tb, Npad)  logits for this B tile
    sum_acc:   VMEM (tb, C, L) f32        lane-wise running sum
    max_acc:   VMEM (tb, C, L) max-dtype  lane-wise running max
    """
    thw = x_ref.shape[-1]
    L = sum_acc.shape[-1]
    k = pl.program_id(1)

    @pl.when(k == 0)
    def _init():
        sum_acc[...] = jnp.zeros_like(sum_acc)
        max_acc[...] = jnp.full_like(max_acc, -jnp.inf)

    def accumulate(valid):
        # `valid` is a trace-time constant: number of in-bounds lanes in this
        # chunk.  Pure-VPU adds/maxes over L-lane slices; a single
        # read-modify-write of the scratch accumulators per chunk.
        n_full = valid // L
        rem = valid - n_full * L
        psum = None
        pmax = None
        for s in range(n_full):
            piece = x_ref[:, :, s * L:(s + 1) * L]
            pf = piece.astype(jnp.float32)
            pm = piece.astype(max_acc.dtype)
            psum = pf if psum is None else psum + pf
            pmax = pm if pmax is None else jnp.maximum(pmax, pm)
        if rem:
            # Only this single ragged slice (last chunk only) pays for the mask.
            piece = x_ref[:, :, n_full * L:(n_full + 1) * L]
            lane = jax.lax.broadcasted_iota(jnp.int32, piece.shape, 2)
            ok = lane < rem
            pf = jnp.where(ok, piece, 0).astype(jnp.float32)
            pm = jnp.where(ok, piece.astype(max_acc.dtype), -jnp.inf)
            psum = pf if psum is None else psum + pf
            pmax = pm if pmax is None else jnp.maximum(pmax, pm)
        sum_acc[...] = sum_acc[...] + psum
        max_acc[...] = jnp.maximum(max_acc[...], pmax)

    tail = hw_true - (n_chunks - 1) * thw   # valid lanes in the last chunk
    if tail == thw:
        # No ragged tail anywhere: single unmasked path for every chunk.
        accumulate(thw)
    else:
        @pl.when(k != n_chunks - 1)
        def _steady():
            accumulate(thw)

        @pl.when(k == n_chunks - 1)
        def _ragged():
            accumulate(tail)

    @pl.when(k == n_chunks - 1)
    def _finalize():
        alpha = alpha_ref[0].astype(jnp.float32)
        ssum = jnp.sum(sum_acc[...], axis=-1)                      # (tb, C)
        smax = jnp.max(max_acc[...], axis=-1).astype(jnp.float32)  # (tb, C)
        avg = ssum * (1.0 / hw_true)
        feat = alpha * smax + (1.0 - alpha) * avg
        logits = jnp.dot(feat, w_ref[...],
                         preferred_element_type=jnp.float32)
        logits = logits + b_ref[...].astype(jnp.float32)
        o_ref[...] = logits[None, :, :].astype(o_ref.dtype)


def mixpool_classifier(x, alpha, fc_weight, fc_bias, *, target_chunk_bytes=None):
    """x: (B, C, H, W); fc_weight: (num_classes, C); fc_bias: (num_classes,)."""
    B, C, H, W = x.shape
    HW = H * W
    N = fc_weight.shape[0]
    if target_chunk_bytes is None:
        target_chunk_bytes = _default_chunk_bytes()

    Npad = _round_up(max(N, 1), 128)
    x3 = x.reshape(B, C, HW)                    # free reshape, native dtype
    x_item = jnp.dtype(x3.dtype).itemsize

    # fc params stay in their native dtype (bf16 heads stay bf16 on the wire).
    w_t = jnp.zeros((C, Npad), fc_weight.dtype).at[:, :N].set(fc_weight.T)
    b_pad = jnp.zeros((1, Npad), fc_bias.dtype).at[:, :N].set(
        fc_bias.reshape(1, N))
    alpha_arr = jnp.asarray(alpha, jnp.float32).reshape(1)

    x_is_float = jnp.issubdtype(x3.dtype, jnp.floating)
    max_dtype = x3.dtype if x_is_float else jnp.float32
    out_dtype = jnp.result_type(x3.dtype, fc_weight.dtype)
    if not jnp.issubdtype(out_dtype, jnp.floating):
        out_dtype = jnp.float32

    # ---- tile sizing --------------------------------------------------------
    MAX_SLICES = 64                      # cap on unrolled 128-lane slices/chunk
    tb = max(1, min(B, target_chunk_bytes // max(1, C * 128 * x_item)))
    if B >= 2:
        tb = min(tb, -(-B // 2))         # ceil(B/2): >= 2 parallel blocks
    bytes_per_col = tb * C * x_item
    if HW <= 128 or (HW * bytes_per_col <= target_chunk_bytes
                     and HW <= MAX_SLICES * 128):
        thw = HW                         # whole spatial extent in one chunk
    else:
        thw = (target_chunk_bytes // bytes_per_col) // 128 * 128
        thw = max(128, min(thw, MAX_SLICES * 128, (HW // 128) * 128))
    n_chunks = int(pl.cdiv(HW, thw))
    nb = int(pl.cdiv(B, tb))
    L = 128 if thw % 128 == 0 else thw   # lane width of the partial accumulators
    grid = (nb, n_chunks)

    # ---- VMEM budget / compiler params --------------------------------------
    w_item = jnp.dtype(w_t.dtype).itemsize
    b_item = jnp.dtype(b_pad.dtype).itemsize
    o_item = jnp.dtype(out_dtype).itemsize
    acc_bytes = tb * C * L * (4 + jnp.dtype(max_dtype).itemsize)
    vmem_need = (2 * tb * C * thw * x_item                   # x double-buffered
                 + 2 * (C * Npad * w_item + Npad * b_item)   # params, worst case
                 + 2 * tb * Npad * o_item                    # output tile
                 + acc_bytes)
    vmem_limit = int(min(56 << 20, max(32 << 20, int(vmem_need * 1.5))))

    kernel = functools.partial(mixpool_cls_kernel, hw_true=HW,
                               n_chunks=n_chunks)

    cost = pl.CostEstimate(
        flops=int(2 * B * C * HW + 2 * B * C * Npad),        # pooling + matmul
        transcendentals=0,
        bytes_accessed=int(x3.size * x_item + w_t.size * w_item
                           + b_pad.size * b_item + nb * tb * Npad * o_item),
    )

    def build(single_buffer_params):
        resident = {}
        if single_buffer_params and hasattr(pl, "Buffered"):
            # Constant index_map -> double buffering buys nothing; save VMEM.
            resident = dict(pipeline_mode=pl.Buffered(1))
        return pl.pallas_call(
            kernel,
            out_shape=jax.ShapeDtypeStruct((nb, tb, Npad), out_dtype),
            grid_spec=pltpu.PrefetchScalarGridSpec(
                num_scalar_prefetch=0,
                grid=grid,
                in_specs=[
                    pl.BlockSpec(memory_space=pltpu.MemorySpace.SMEM),   # alpha
                    pl.BlockSpec((tb, C, thw), lambda i, k: (i, 0, k)),  # x chunk
                    pl.BlockSpec((C, Npad), lambda i, k: (0, 0),
                                 **resident),                            # fc W^T
                    pl.BlockSpec((1, Npad), lambda i, k: (0, 0),
                                 **resident),                            # fc bias
                ],
                out_specs=pl.BlockSpec((1, tb, Npad), lambda i, k: (i, 0, 0)),
                scratch_shapes=[
                    pltpu.VMEM((tb, C, L), jnp.float32),  # lane-wise running sum
                    pltpu.VMEM((tb, C, L), max_dtype),    # lane-wise running max
                ],
            ),
            compiler_params=pltpu.CompilerParams(
                dimension_semantics=("parallel", "arbitrary"),
                vmem_limit_bytes=vmem_limit,
            ),
            cost_estimate=cost,
        )

    try:
        out = build(True)(alpha_arr, x3, w_t, b_pad)
    except Exception:
        # pl.Buffered(1) not supported by this jax build; fall back to the
        # default (double-buffered) resident weight/bias.
        out = build(False)(alpha_arr, x3, w_t, b_pad)

    return out.reshape(nb * tb, Npad)[:B, :N]


if __name__ == "__main__":
    key = jax.random.PRNGKey(0)
    B, C, H, W = 2, 4, 16, 16
    num_classes = 10

    kx, kw, kb = jax.random.split(key, 3)
    x = jax.random.normal(kx, (B, C, H, W), dtype=jnp.float32)
    # Deterministic synthetic parameters (mimic nn.Linear / nn.Parameter init).
    fc_weight = jax.random.normal(kw, (num_classes, C), dtype=jnp.float32) * 0.1
    fc_bias = jax.random.normal(kb, (num_classes,), dtype=jnp.float32) * 0.1
    alpha = jnp.float32(0.5)

    out = mixpool_classifier(x, alpha, fc_weight, fc_bias)
    out = jax.block_until_ready(out)

    # Pure-JAX reference check.
    avg = jnp.mean(x, axis=(2, 3))
    mx = jnp.max(x, axis=(2, 3))
    feat = alpha * mx + (1.0 - alpha) * avg
    ref = feat @ fc_weight.T + fc_bias
    np.testing.assert_allclose(np.asarray(out), np.asarray(ref),
                               rtol=1e-4, atol=1e-4)

    print("KERNEL_OK")
</pallas_src>

<mosaic_0001>
module attributes {stable_mosaic.version = 11 : i64} {
  func.func @mixpool_cls_kernel(%arg0: i32, %arg1: i32, %arg2: memref<1xf32, #tpu.memory_space<smem>>, %arg3: memref<1x4x256xf32, #tpu.memory_space<vmem>>, %arg4: memref<4x128xf32, #tpu.memory_space<vmem>>, %arg5: memref<1x128xf32, #tpu.memory_space<vmem>>, %arg6: memref<1x1x128xf32, #tpu.memory_space<vmem>>, %arg7: memref<1x4x128xf32, #tpu.memory_space<vmem>>, %arg8: memref<1x4x128xf32, #tpu.memory_space<vmem>>) attributes {dimension_semantics = [#tpu.dimension_semantics<parallel>, #tpu.dimension_semantics<arbitrary>], iteration_bounds = array<i64: 2, 1>, scalar_prefetch = 0 : i64, scratch_operands = 2 : i64, tpu.core_type = #tpu.core_type<tc>, window_params = [{transform_indices = @transform_0, window_bounds = array<i64: 1>}, {transform_indices = @transform_1, window_bounds = array<i64: 1, 4, 256>}, {pipeline_mode = #tpu.pipeline_mode<synchronous>, transform_indices = @transform_2, window_bounds = array<i64: 4, 128>}, {pipeline_mode = #tpu.pipeline_mode<synchronous>, transform_indices = @transform_3, window_bounds = array<i64: 1, 128>}, {transform_indices = @transform_4, window_bounds = array<i64: 1, 1, 128>}]} {
    %c0_i32 = arith.constant 0 : i32
    %0 = arith.cmpi eq, %arg1, %c0_i32 : i32
    %1 = arith.extui %0 : i1 to i32
    %c0_i32_0 = arith.constant 0 : i32
    %2 = arith.cmpi ne, %1, %c0_i32_0 : i32
    scf.if %2 {
      %cst = arith.constant 0.000000e+00 : f32
      %16 = vector.broadcast %cst : f32 to vector<1x4x128xf32>
      %c0_19 = arith.constant 0 : index
      %c0_20 = arith.constant 0 : index
      %c0_21 = arith.constant 0 : index
      %17 = vector.load %arg7[%c0_19, %c0_20, %c0_21] : memref<1x4x128xf32, #tpu.memory_space<vmem>>, vector<1x4x128xf32>
      tpu.vector_store %arg7[%c0_19, %c0_20, %c0_21], %16 {strides = array<i32>} : memref<1x4x128xf32, #tpu.memory_space<vmem>>, vector<1x4x128xf32>,
      %cst_22 = arith.constant 0xFF800000 : f32
      %18 = vector.broadcast %cst_22 : f32 to vector<1x4x128xf32>
      %c0_23 = arith.constant 0 : index
      %c0_24 = arith.constant 0 : index
      %c0_25 = arith.constant 0 : index
      %19 = vector.load %arg8[%c0_23, %c0_24, %c0_25] : memref<1x4x128xf32, #tpu.memory_space<vmem>>, vector<1x4x128xf32>
      tpu.vector_store %arg8[%c0_23, %c0_24, %c0_25], %18 {strides = array<i32>} : memref<1x4x128xf32, #tpu.memory_space<vmem>>, vector<1x4x128xf32>,
    } else {
    }
    %c0 = arith.constant 0 : index
    %c0_1 = arith.constant 0 : index
    %c0_2 = arith.constant 0 : index
    %3 = vector.load %arg3[%c0, %c0_1, %c0_2] : memref<1x4x256xf32, #tpu.memory_space<vmem>>, vector<1x4x128xf32>
    %c0_3 = arith.constant 0 : index
    %c0_4 = arith.constant 0 : index
    %c128 = arith.constant 128 : index
    %4 = vector.load %arg3[%c0_3, %c0_4, %c128] : memref<1x4x256xf32, #tpu.memory_space<vmem>>, vector<1x4x128xf32>
    %5 = arith.addf %3, %4 : vector<1x4x128xf32>
    %6 = arith.maximumf %3, %4 : vector<1x4x128xf32>
    %c0_5 = arith.constant 0 : index
    %c0_6 = arith.constant 0 : index
    %c0_7 = arith.constant 0 : index
    %7 = vector.load %arg7[%c0_5, %c0_6, %c0_7] : memref<1x4x128xf32, #tpu.memory_space<vmem>>, vector<1x4x128xf32>
    %8 = arith.addf %7, %5 : vector<1x4x128xf32>
    %c0_8 = arith.constant 0 : index
    %c0_9 = arith.constant 0 : index
    %c0_10 = arith.constant 0 : index
    %9 = vector.load %arg7[%c0_8, %c0_9, %c0_10] : memref<1x4x128xf32, #tpu.memory_space<vmem>>, vector<1x4x128xf32>
    tpu.vector_store %arg7[%c0_8, %c0_9, %c0_10], %8 {strides = array<i32>} : memref<1x4x128xf32, #tpu.memory_space<vmem>>, vector<1x4x128xf32>,
    %c0_11 = arith.constant 0 : index
    %c0_12 = arith.constant 0 : index
    %c0_13 = arith.constant 0 : index
    %10 = vector.load %arg8[%c0_11, %c0_12, %c0_13] : memref<1x4x128xf32, #tpu.memory_space<vmem>>, vector<1x4x128xf32>
    %11 = arith.maximumf %10, %6 : vector<1x4x128xf32>
    %c0_14 = arith.constant 0 : index
    %c0_15 = arith.constant 0 : index
    %c0_16 = arith.constant 0 : index
    %12 = vector.load %arg8[%c0_14, %c0_15, %c0_16] : memref<1x4x128xf32, #tpu.memory_space<vmem>>, vector<1x4x128xf32>
    tpu.vector_store %arg8[%c0_14, %c0_15, %c0_16], %11 {strides = array<i32>} : memref<1x4x128xf32, #tpu.memory_space<vmem>>, vector<1x4x128xf32>,
    %c0_i32_17 = arith.constant 0 : i32
    %13 = arith.cmpi eq, %arg1, %c0_i32_17 : i32
    %14 = arith.extui %13 : i1 to i32
    %c0_i32_18 = arith.constant 0 : i32
    %15 = arith.cmpi ne, %14, %c0_i32_18 : i32
    scf.if %15 {
      %c0_19 = arith.constant 0 : index
      %16 = memref.load %arg2[%c0_19] : memref<1xf32, #tpu.memory_space<smem>>
      %c0_20 = arith.constant 0 : index
      %c0_21 = arith.constant 0 : index
      %c0_22 = arith.constant 0 : index
      %17 = vector.load %arg7[%c0_20, %c0_21, %c0_22] : memref<1x4x128xf32, #tpu.memory_space<vmem>>, vector<1x4x128xf32>
      %cst = arith.constant dense<0.000000e+00> : vector<1x4xf32>
      %18 = vector.multi_reduction <add>, %17, %cst [2] : vector<1x4x128xf32> to vector<1x4xf32>
      %c0_23 = arith.constant 0 : index
      %c0_24 = arith.constant 0 : index
      %c0_25 = arith.constant 0 : index
      %19 = vector.load %arg8[%c0_23, %c0_24, %c0_25] : memref<1x4x128xf32, #tpu.memory_space<vmem>>, vector<1x4x128xf32>
      %cst_26 = arith.constant dense<0xFF800000> : vector<1x4xf32>
      %20 = vector.multi_reduction <maximumf>, %19, %cst_26 [2] : vector<1x4x128xf32> to vector<1x4xf32>
      %cst_27 = arith.constant 3.906250e-03 : f32
      %21 = vector.broadcast %cst_27 : f32 to vector<1x4xf32>
      %22 = arith.mulf %18, %21 : vector<1x4xf32>
      %23 = vector.broadcast %16 : f32 to vector<1x4xf32>
      %24 = arith.mulf %23, %20 : vector<1x4xf32>
      %cst_28 = arith.constant 1.000000e+00 : f32
      %25 = arith.subf %cst_28, %16 : f32
      %26 = vector.broadcast %25 : f32 to vector<1x4xf32>
      %27 = arith.mulf %26, %22 : vector<1x4xf32>
      %28 = arith.addf %24, %27 : vector<1x4xf32>
      %c0_29 = arith.constant 0 : index
      %c0_30 = arith.constant 0 : index
      %29 = vector.load %arg4[%c0_29, %c0_30] : memref<4x128xf32, #tpu.memory_space<vmem>>, vector<4x128xf32>
      %cst_31 = arith.constant dense<0.000000e+00> : vector<1x128xf32>
      %30 = tpu.matmul %28, %29, %cst_31 {dimension_numbers = #tpu.dot_dimension_numbers<[1], [0], [0], [1], [0, 0, 1, 1], [], []>} : vector<1x4xf32>, vector<4x128xf32>, vector<1x128xf32> -> vector<1x128xf32>
      %c0_32 = arith.constant 0 : index
      %c0_33 = arith.constant 0 : index
      %31 = vector.load %arg5[%c0_32, %c0_33] : memref<1x128xf32, #tpu.memory_space<vmem>>, vector<1x128xf32>
      %32 = arith.addf %30, %31 : vector<1x128xf32>
      %33 = vector.shape_cast %32 : vector<1x128xf32> to vector<1x1x128xf32>
      %c0_34 = arith.constant 0 : index
      %c0_35 = arith.constant 0 : index
      %c0_36 = arith.constant 0 : index
      %34 = vector.load %arg6[%c0_34, %c0_35, %c0_36] : memref<1x1x128xf32, #tpu.memory_space<vmem>>, vector<1x1x128xf32>
      tpu.vector_store %arg6[%c0_34, %c0_35, %c0_36], %33 {strides = array<i32>} : memref<1x1x128xf32, #tpu.memory_space<vmem>>, vector<1x1x128xf32>,
    } else {
    }
    return
  }
  func.func @transform_0(%arg0: i32, %arg1: i32) -> i32 {
    %c0_i32 = arith.constant 0 : i32
    %c0_i32_0 = arith.constant 0 : i32
    return %c0_i32 : i32
  }
  func.func @transform_1(%arg0: i32, %arg1: i32) -> (i32, i32, i32) {
    %c0_i32 = arith.constant 0 : i32
    %c0_i32_0 = arith.constant 0 : i32
    return %arg0, %c0_i32, %arg1 : i32, i32, i32
  }
  func.func @transform_2(%arg0: i32, %arg1: i32) -> (i32, i32) {
    %c0_i32 = arith.constant 0 : i32
    %c0_i32_0 = arith.constant 0 : i32
    %c0_i32_1 = arith.constant 0 : i32
    return %c0_i32, %c0_i32_0 : i32, i32
  }
  func.func @transform_3(%arg0: i32, %arg1: i32) -> (i32, i32) {
    %c0_i32 = arith.constant 0 : i32
    %c0_i32_0 = arith.constant 0 : i32
    %c0_i32_1 = arith.constant 0 : i32
    return %c0_i32, %c0_i32_0 : i32, i32
  }
  func.func @transform_4(%arg0: i32, %arg1: i32) -> (i32, i32, i32) {
    %c0_i32 = arith.constant 0 : i32
    %c0_i32_0 = arith.constant 0 : i32
    %c0_i32_1 = arith.constant 0 : i32
    return %arg0, %c0_i32, %c0_i32_0 : i32, i32, i32
  }
}

module attributes {stable_mosaic.version = 11 : i64} {
  func.func @mixpool_cls_kernel(%arg0: i32, %arg1: i32, %arg2: memref<1xf32, #tpu.memory_space<smem>>, %arg3: memref<1x4x256xf32, #tpu.memory_space<vmem>>, %arg4: memref<4x128xf32, #tpu.memory_space<vmem>>, %arg5: memref<1x128xf32, #tpu.memory_space<vmem>>, %arg6: memref<1x1x128xf32, #tpu.memory_space<vmem>>, %arg7: memref<1x4x128xf32, #tpu.memory_space<vmem>>, %arg8: memref<1x4x128xf32, #tpu.memory_space<vmem>>) attributes {dimension_semantics = [#tpu.dimension_semantics<parallel>, #tpu.dimension_semantics<arbitrary>], iteration_bounds = array<i64: 2, 1>, scalar_prefetch = 0 : i64, scratch_operands = 2 : i64, tpu.core_type = #tpu.core_type<tc>, window_params = [{transform_indices = @transform_0, window_bounds = array<i64: 1>}, {transform_indices = @transform_1, window_bounds = array<i64: 1, 4, 256>}, {pipeline_mode = #tpu.pipeline_mode<synchronous>, transform_indices = @transform_2, window_bounds = array<i64: 4, 128>}, {pipeline_mode = #tpu.pipeline_mode<synchronous>, transform_indices = @transform_3, window_bounds = array<i64: 1, 128>}, {transform_indices = @transform_4, window_bounds = array<i64: 1, 1, 128>}]} {
    %c0_i32 = arith.constant 0 : i32
    %0 = arith.cmpi eq, %arg1, %c0_i32 : i32
    %1 = arith.extui %0 : i1 to i32
    %c0_i32_0 = arith.constant 0 : i32
    %2 = arith.cmpi ne, %1, %c0_i32_0 : i32
    scf.if %2 {
      %cst = arith.constant 0.000000e+00 : f32
      %16 = vector.broadcast %cst : f32 to vector<1x4x128xf32>
      %c0_19 = arith.constant 0 : index
      %c0_20 = arith.constant 0 : index
      %c0_21 = arith.constant 0 : index
      %17 = vector.load %arg7[%c0_19, %c0_20, %c0_21] : memref<1x4x128xf32, #tpu.memory_space<vmem>>, vector<1x4x128xf32>
      tpu.vector_store %arg7[%c0_19, %c0_20, %c0_21], %16 {strides = array<i32>} : memref<1x4x128xf32, #tpu.memory_space<vmem>>, vector<1x4x128xf32>,
      %cst_22 = arith.constant 0xFF800000 : f32
      %18 = vector.broadcast %cst_22 : f32 to vector<1x4x128xf32>
      %c0_23 = arith.constant 0 : index
      %c0_24 = arith.constant 0 : index
      %c0_25 = arith.constant 0 : index
      %19 = vector.load %arg8[%c0_23, %c0_24, %c0_25] : memref<1x4x128xf32, #tpu.memory_space<vmem>>, vector<1x4x128xf32>
      tpu.vector_store %arg8[%c0_23, %c0_24, %c0_25], %18 {strides = array<i32>} : memref<1x4x128xf32, #tpu.memory_space<vmem>>, vector<1x4x128xf32>,
    } else {
    }
    %c0 = arith.constant 0 : index
    %c0_1 = arith.constant 0 : index
    %c0_2 = arith.constant 0 : index
    %3 = vector.load %arg3[%c0, %c0_1, %c0_2] : memref<1x4x256xf32, #tpu.memory_space<vmem>>, vector<1x4x128xf32>
    %c0_3 = arith.constant 0 : index
    %c0_4 = arith.constant 0 : index
    %c128 = arith.constant 128 : index
    %4 = vector.load %arg3[%c0_3, %c0_4, %c128] : memref<1x4x256xf32, #tpu.memory_space<vmem>>, vector<1x4x128xf32>
    %5 = arith.addf %3, %4 : vector<1x4x128xf32>
    %6 = arith.maximumf %3, %4 : vector<1x4x128xf32>
    %c0_5 = arith.constant 0 : index
    %c0_6 = arith.constant 0 : index
    %c0_7 = arith.constant 0 : index
    %7 = vector.load %arg7[%c0_5, %c0_6, %c0_7] : memref<1x4x128xf32, #tpu.memory_space<vmem>>, vector<1x4x128xf32>
    %8 = arith.addf %7, %5 : vector<1x4x128xf32>
    %c0_8 = arith.constant 0 : index
    %c0_9 = arith.constant 0 : index
    %c0_10 = arith.constant 0 : index
    %9 = vector.load %arg7[%c0_8, %c0_9, %c0_10] : memref<1x4x128xf32, #tpu.memory_space<vmem>>, vector<1x4x128xf32>
    tpu.vector_store %arg7[%c0_8, %c0_9, %c0_10], %8 {strides = array<i32>} : memref<1x4x128xf32, #tpu.memory_space<vmem>>, vector<1x4x128xf32>,
    %c0_11 = arith.constant 0 : index
    %c0_12 = arith.constant 0 : index
    %c0_13 = arith.constant 0 : index
    %10 = vector.load %arg8[%c0_11, %c0_12, %c0_13] : memref<1x4x128xf32, #tpu.memory_space<vmem>>, vector<1x4x128xf32>
    %11 = arith.maximumf %10, %6 : vector<1x4x128xf32>
    %c0_14 = arith.constant 0 : index
    %c0_15 = arith.constant 0 : index
    %c0_16 = arith.constant 0 : index
    %12 = vector.load %arg8[%c0_14, %c0_15, %c0_16] : memref<1x4x128xf32, #tpu.memory_space<vmem>>, vector<1x4x128xf32>
    tpu.vector_store %arg8[%c0_14, %c0_15, %c0_16], %11 {strides = array<i32>} : memref<1x4x128xf32, #tpu.memory_space<vmem>>, vector<1x4x128xf32>,
    %c0_i32_17 = arith.constant 0 : i32
    %13 = arith.cmpi eq, %arg1, %c0_i32_17 : i32
    %14 = arith.extui %13 : i1 to i32
    %c0_i32_18 = arith.constant 0 : i32
    %15 = arith.cmpi ne, %14, %c0_i32_18 : i32
    scf.if %15 {
      %c0_19 = arith.constant 0 : index
      %16 = memref.load %arg2[%c0_19] : memref<1xf32, #tpu.memory_space<smem>>
      %c0_20 = arith.constant 0 : index
      %c0_21 = arith.constant 0 : index
      %c0_22 = arith.constant 0 : index
      %17 = vector.load %arg7[%c0_20, %c0_21, %c0_22] : memref<1x4x128xf32, #tpu.memory_space<vmem>>, vector<1x4x128xf32>
      %cst = arith.constant dense<0.000000e+00> : vector<1x4xf32>
      %18 = vector.multi_reduction <add>, %17, %cst [2] : vector<1x4x128xf32> to vector<1x4xf32>
      %c0_23 = arith.constant 0 : index
      %c0_24 = arith.constant 0 : index
      %c0_25 = arith.constant 0 : index
      %19 = vector.load %arg8[%c0_23, %c0_24, %c0_25] : memref<1x4x128xf32, #tpu.memory_space<vmem>>, vector<1x4x128xf32>
      %cst_26 = arith.constant dense<0xFF800000> : vector<1x4xf32>
      %20 = vector.multi_reduction <maximumf>, %19, %cst_26 [2] : vector<1x4x128xf32> to vector<1x4xf32>
      %cst_27 = arith.constant 3.906250e-03 : f32
      %21 = vector.broadcast %cst_27 : f32 to vector<1x4xf32>
      %22 = arith.mulf %18, %21 : vector<1x4xf32>
      %23 = vector.broadcast %16 : f32 to vector<1x4xf32>
      %24 = arith.mulf %23, %20 : vector<1x4xf32>
      %cst_28 = arith.constant 1.000000e+00 : f32
      %25 = arith.subf %cst_28, %16 : f32
      %26 = vector.broadcast %25 : f32 to vector<1x4xf32>
      %27 = arith.mulf %26, %22 : vector<1x4xf32>
      %28 = arith.addf %24, %27 : vector<1x4xf32>
      %c0_29 = arith.constant 0 : index
      %c0_30 = arith.constant 0 : index
      %29 = vector.load %arg4[%c0_29, %c0_30] : memref<4x128xf32, #tpu.memory_space<vmem>>, vector<4x128xf32>
      %cst_31 = arith.constant dense<0.000000e+00> : vector<1x128xf32>
      %30 = tpu.matmul %28, %29, %cst_31 {dimension_numbers = #tpu.dot_dimension_numbers<[1], [0], [0], [1], [0, 0, 1, 1], [], []>} : vector<1x4xf32>, vector<4x128xf32>, vector<1x128xf32> -> vector<1x128xf32>
      %c0_32 = arith.constant 0 : index
      %c0_33 = arith.constant 0 : index
      %31 = vector.load %arg5[%c0_32, %c0_33] : memref<1x128xf32, #tpu.memory_space<vmem>>, vector<1x128xf32>
      %32 = arith.addf %30, %31 : vector<1x128xf32>
      %33 = vector.shape_cast %32 : vector<1x128xf32> to vector<1x1x128xf32>
      %c0_34 = arith.constant 0 : index
      %c0_35 = arith.constant 0 : index
      %c0_36 = arith.constant 0 : index
      %34 = vector.load %arg6[%c0_34, %c0_35, %c0_36] : memref<1x1x128xf32, #tpu.memory_space<vmem>>, vector<1x1x128xf32>
      tpu.vector_store %arg6[%c0_34, %c0_35, %c0_36], %33 {strides = array<i32>} : memref<1x1x128xf32, #tpu.memory_space<vmem>>, vector<1x1x128xf32>,
    } else {
    }
    return
  }
  func.func @transform_0(%arg0: i32, %arg1: i32) -> i32 {
    %c0_i32 = arith.constant 0 : i32
    %c0_i32_0 = arith.constant 0 : i32
    return %c0_i32 : i32
  }
  func.func @transform_1(%arg0: i32, %arg1: i32) -> (i32, i32, i32) {
    %c0_i32 = arith.constant 0 : i32
    %c0_i32_0 = arith.constant 0 : i32
    return %arg0, %c0_i32, %arg1 : i32, i32, i32
  }
  func.func @transform_2(%arg0: i32, %arg1: i32) -> (i32, i32) {
    %c0_i32 = arith.constant 0 : i32
    %c0_i32_0 = arith.constant 0 : i32
    %c0_i32_1 = arith.constant 0 : i32
    return %c0_i32, %c0_i32_0 : i32, i32
  }
  func.func @transform_3(%arg0: i32, %arg1: i32) -> (i32, i32) {
    %c0_i32 = arith.constant 0 : i32
    %c0_i32_0 = arith.constant 0 : i32
    %c0_i32_1 = arith.constant 0 : i32
    return %c0_i32, %c0_i32_0 : i32, i32
  }
  func.func @transform_4(%arg0: i32, %arg1: i32) -> (i32, i32, i32) {
    %c0_i32 = arith.constant 0 : i32
    %c0_i32_0 = arith.constant 0 : i32
    %c0_i32_1 = arith.constant 0 : i32
    return %arg0, %c0_i32, %c0_i32_0 : i32, i32, i32
  }
}

</mosaic_0001>

<llo_original>
// kernel: tpu_custom_call.1
$region0: #{tpu_custom_call.1}
  #allocation0 [shape = 'u32[]', space=smem, size = 0x4, offset = 0x4, fixed_abs, tag = 'smem constant byte address 0x4 - core index']
  #allocation1 [shape = 'u32[144,128]{1,0:T(1,128)}', space=vmem, size = 0x12000, scoped, tag = 'internal scratch']
  #allocation2 [shape = 'f32[1,4,128]{2,1,0:T(4,128)}', space=vmem, size = 0x800, scoped, tag = 'scratch operand']
  #allocation3 [shape = 'f32[1,4,128]{2,1,0:T(4,128)}', space=vmem, size = 0x800, scoped, tag = 'scratch operand']
  #allocation4 [shape = 'f32[1]{0:T(128)S(6)}', space=smem, size = 0x200, scoped, tag = 'scoped memory for tpu_custom_call.1']
  %s0 = inlined_call_operand.<no memory space> [shape: f32[1], index: 0, kind: input, shape index: {}]
  %s1 = inlined_call_operand.hbm [shape: f32[2,4,256], index: 1, kind: input, shape index: {}]
  %s2 = inlined_call_operand.vmem [shape: f32[4,128], index: 2, kind: input, shape index: {}]
  %s3 = inlined_call_operand.vmem [shape: f32[1,128], index: 3, kind: input, shape index: {}]
  %s4 = inlined_call_operand.hbm [shape: f32[2,1,128], index: 4, kind: output, shape index: {}]
  %s5 = sld [smem:[#allocation0]]
  $region61: #{tpu_custom_call.1} parent=0
    _
  %s7 = ssub.s32 1, %s5
  %s8 = scalar_select 0, %s7, %s5
  %9 = sst [smem:[#allocation4]] %s0
  $region1: #{tpu_custom_call.1} parent=0
    #allocation5 [shape = 'u8[8192]{0}', space=vmem, size = 0x2000, scoped, tag = 'input window, operand 1']
    #allocation6 [shape = 's32[2]{0}', space=sflag, size = 0x8, scoped, tag = 'scoped memory for tpu_custom_call.1']
    #allocation7 [shape = 's32[2]{0}', space=sflag, size = 0x8, scoped, tag = 'scoped memory for tpu_custom_call.1']
    #allocation8 [shape = 'u8[1024]{0}', space=vmem, size = 0x400, scoped, tag = 'output window, operand 0']
    %10 = vsyncpa [#allocation6], 0
    %s11 = scalar_lea.sflag [#allocation6], 1
    %12 = vsyncpa %s11, 0
    %13 = vsyncpa [#allocation7], 0
    %s14 = scalar_lea.sflag [#allocation7], 1
    %15 = vsyncpa %s14, 0
    loop: start=0, step=1, limit=4
    $region2: #{tpu_custom_call.1} parent=1 // loop_pre_header
      _
    $region3: #{tpu_custom_call.1} parent=1 // loop_header
      %s17 = sphi 0, %s21
      %p18 = scmp.ge.s32.totalorder %s17, 4
      %s24 = sphi 0, %s36
      %s25 = sphi 0, %s32
      %s26 = sphi 0, %s24
      %s27 = sphi 0, %s25
      %s28 = sphi 0, %s26
      %s29 = sphi 0, %s27
      %s37 = sphi 0, %s37
      %s39 = sphi 0, %s37
      %s40 = sphi 0, %s39
      %s54 = sphi 0, %s40
      %s62 = sphi 0, %s64
      %s65 = sphi 0, %s62
      %s66 = sphi 0, %s65
      %s82 = sphi 0, %s66
      %s86 = sphi 0, %s86
      %s88 = sphi 0, %s86
      %s89 = sphi 0, %s88
      %s103 = sphi 0, %s89
      %s107 = sphi 0, %s107
      %s109 = sphi 0, %s107
      %s110 = sphi 0, %s109
      %s124 = sphi 0, %s110
      %s130 = sphi 0, %s132
      %s133 = sphi 0, %s130
      %s134 = sphi 0, %s133
      %s150 = sphi 0, %s134
    $region4: #{tpu_custom_call.1} parent=1 // loop_header_branch
      %20 = sbr.rel (%p18) target = $region8
    $region5: #{tpu_custom_call.1} parent=1 // loop_body
      %s22 = ssub.s32 %s17, 1
      %s23 = ssub.s32 %s17, 2
      %s30 = sadd.s32 1, %s25
      %p31 = scmp.ge.s32.totalorder %s30, 1
      %s32 = scalar_select %p31, 0, %s30
      %s33 = sadd.s32 1, %s24
      %s34 = scalar_select %p31, %s33, %s24
      %p35 = scmp.ge.s32.totalorder %s34, 2
      %s36 = scalar_select %p35, 0, %s34
      %s38 = sadd.s32 %s37, 1
      %p41 = scmp.eq.s32.totalorder %s17, 1
      %p42 = scmp.ne.s32.totalorder %s37, %s39
      %p43 = scmp.eq.s32.totalorder %s17, 0
      %p44 = por %p42, %p43
      %p45 = scmp.ne.s32.totalorder %s37, %s39
      %p46 = scmp.eq.s32.totalorder %s22, 1
      %p47 = por %p45, %p46
      %p48 = scmp.ne.s32.totalorder %s39, %s40
      %p49 = scmp.eq.s32.totalorder %s22, 0
      %p50 = por %p48, %p49
      %p51 = scmp.ne.s32.totalorder %s39, %s40
      %p52 = scmp.eq.s32.totalorder %s23, 1
      %p53 = por %p51, %p52
      %p55 = scmp.ne.s32.totalorder %s40, %s54
      %p56 = scmp.eq.s32.totalorder %s23, 0
      %p57 = por %p55, %p56
      %s58 = ssub.s32 %s24, %s36
      %s59 = ssub.s32 %s25, %s32
      %s60 = sor.u32 %s58, %s59
      %p61 = scmp.eq.s32.totalorder %s60, 0
      %s63 = sadd.s32 %s62, 1
      %s64 = scalar_select %p61, %s62, %s63
      %p67 = pneg %p61
      %p68 = scmp.eq.s32.totalorder %s17, 1
      %p69 = por %p67, %p68
      %p70 = scmp.ne.s32.totalorder %s62, %s65
      %p71 = scmp.eq.s32.totalorder %s17, 0
      %p72 = por %p70, %p71
      %p73 = scmp.ne.s32.totalorder %s62, %s65
      %p74 = scmp.eq.s32.totalorder %s22, 1
      %p75 = por %p73, %p74
      %p76 = scmp.ne.s32.totalorder %s65, %s66
      %p77 = scmp.eq.s32.totalorder %s22, 0
      %p78 = por %p76, %p77
      %p79 = scmp.ne.s32.totalorder %s65, %s66
      %p80 = scmp.eq.s32.totalorder %s23, 1
      %p81 = por %p79, %p80
      %p83 = scmp.ne.s32.totalorder %s66, %s82
      %p84 = scmp.eq.s32.totalorder %s23, 0
      %p85 = por %p83, %p84
      %s87 = sadd.s32 %s86, 1
      %p90 = scmp.eq.s32.totalorder %s17, 1
      %p91 = scmp.ne.s32.totalorder %s86, %s88
      %p92 = scmp.eq.s32.totalorder %s17, 0
      %p93 = por %p91, %p92
      %p94 = scmp.ne.s32.totalorder %s86, %s88
      %p95 = scmp.eq.s32.totalorder %s22, 1
      %p96 = por %p94, %p95
      %p97 = scmp.ne.s32.totalorder %s88, %s89
      %p98 = scmp.eq.s32.totalorder %s22, 0
      %p99 = por %p97, %p98
      %p100 = scmp.ne.s32.totalorder %s88, %s89
      %p101 = scmp.eq.s32.totalorder %s23, 1
      %p102 = por %p100, %p101
      %p104 = scmp.ne.s32.totalorder %s89, %s103
      %p105 = scmp.eq.s32.totalorder %s23, 0
      %p106 = por %p104, %p105
      %s108 = sadd.s32 %s107, 1
      %p111 = scmp.eq.s32.totalorder %s17, 1
      %p112 = scmp.ne.s32.totalorder %s107, %s109
      %p113 = scmp.eq.s32.totalorder %s17, 0
      %p114 = por %p112, %p113
      %p115 = scmp.ne.s32.totalorder %s107, %s109
      %p116 = scmp.eq.s32.totalorder %s22, 1
      %p117 = por %p115, %p116
      %p118 = scmp.ne.s32.totalorder %s109, %s110
      %p119 = scmp.eq.s32.totalorder %s22, 0
      %p120 = por %p118, %p119
      %p121 = scmp.ne.s32.totalorder %s109, %s110
      %p122 = scmp.eq.s32.totalorder %s23, 1
      %p123 = por %p121, %p122
      %p125 = scmp.ne.s32.totalorder %s110, %s124
      %p126 = scmp.eq.s32.totalorder %s23, 0
      %p127 = por %p125, %p126
      %s128 = ssub.s32 %s24, %s36
      %p129 = scmp.eq.s32.totalorder %s128, 0
      %s131 = sadd.s32 %s130, 1
      %s132 = scalar_select %p129, %s130, %s131
      %p135 = pneg %p129
      %p136 = scmp.eq.s32.totalorder %s17, 1
      %p137 = por %p135, %p136
      %p138 = scmp.ne.s32.totalorder %s130, %s133
      %p139 = scmp.eq.s32.totalorder %s17, 0
      %p140 = por %p138, %p139
      %p141 = scmp.ne.s32.totalorder %s130, %s133
      %p142 = scmp.eq.s32.totalorder %s22, 1
      %p143 = por %p141, %p142
      %p144 = scmp.ne.s32.totalorder %s133, %s134
      %p145 = scmp.eq.s32.totalorder %s22, 0
      %p146 = por %p144, %p145
      %p147 = scmp.ne.s32.totalorder %s133, %s134
      %p148 = scmp.eq.s32.totalorder %s23, 1
      %p149 = por %p147, %p148
      %p151 = scmp.ne.s32.totalorder %s134, %s150
      %p152 = scmp.eq.s32.totalorder %s23, 0
      %p153 = por %p151, %p152
      %p154 = scmp.le.s32.totalorder 1, %s17
      %p155 = scmp.lt.s32.totalorder %s17, 3
      %p156 = pnand %p154, %p155
      %p157 = pneg %p156
      // Predicated region
      $region9: #{tpu_custom_call.1} parent=5 // pred_check
        _
      $region10: #{tpu_custom_call.1} parent=5 // pred_check_branch
        %159 = sbr.rel (%p156) target = $region12
      $region11: #{tpu_custom_call.1} parent=5 // pred_region
        %s160 = ssub.s32 %s17, 1
        // Predicated region
        $region13: #{tpu_custom_call.1} parent=11 // pred_check
          %p161 = pneg %p50
        $region14: #{tpu_custom_call.1} parent=11 // pred_check_branch
          %163 = sbr.rel (%p161) target = $region16
        $region15: #{tpu_custom_call.1} parent=11 // pred_region
          _
        $region16: #{tpu_custom_call.1} parent=11 // pred_fallthru
          _
        // Predicated region
        $region17: #{tpu_custom_call.1} parent=11 // pred_check
          %p164 = pneg %p99
        $region18: #{tpu_custom_call.1} parent=11 // pred_check_branch
          %166 = sbr.rel (%p164) target = $region20
        $region19: #{tpu_custom_call.1} parent=11 // pred_region
          _
        $region20: #{tpu_custom_call.1} parent=11 // pred_fallthru
          _
        // Predicated region
        $region21: #{tpu_custom_call.1} parent=11 // pred_check
          %p167 = pneg %p120
        $region22: #{tpu_custom_call.1} parent=11 // pred_check_branch
          %169 = sbr.rel (%p167) target = $region24
        $region23: #{tpu_custom_call.1} parent=11 // pred_region
          _
        $region24: #{tpu_custom_call.1} parent=11 // pred_fallthru
          _
      $region12: #{tpu_custom_call.1} parent=5 // pred_fallthru
        _
      %p170 = scmp.lt.s32.totalorder %s17, 2
      // Predicated region
      $region25: #{tpu_custom_call.1} parent=5 // pred_check
        %p171 = pneg %p170
      $region26: #{tpu_custom_call.1} parent=5 // pred_check_branch
        %173 = sbr.rel (%p171) target = $region28
      $region27: #{tpu_custom_call.1} parent=5 // pred_region
        // Predicated region
        $region29: #{tpu_custom_call.1} parent=27 // pred_check
          %p174 = pneg %p72
        $region30: #{tpu_custom_call.1} parent=27 // pred_check_branch
          %176 = sbr.rel (%p174) target = $region32
        $region31: #{tpu_custom_call.1} parent=27 // pred_region
          %s177 = sand.u32 %s62, 1
          %s178 = scalar_lea.sflag [#allocation6], %s177
          %s179 = sand.u32 %s62, 1
          %s180 = smul.addr %s179, 8
          %s181 = scalar_lea.vmem [#allocation5], %s180
          %s182 = smul.u32 2, %s25
          %s184 = ssub.s32 128, 128
          %185 = vsyncadd %s178, %s184
          %s186 = smul.addr %s24, 2
          %s187 = sadd.s32 %s182, %s186
          %s188 = smul.addr %s187, 64
          %s189 = scalar_lea.hbm %s1, %s188
          %s191 = sshll.u32 %s181, 4
          %s192 = int_to_ptr.vmem [resolvable:$true] %s191
          %194 = dma.hbm_to_vmem [thread:$0]  %s189, 128, %s192, %s178
        $region32: #{tpu_custom_call.1} parent=27 // pred_fallthru
          _
      $region28: #{tpu_custom_call.1} parent=5 // pred_fallthru
        _
      %p195 = scmp.le.s32.totalorder 1, %s17
      %p196 = scmp.lt.s32.totalorder %s17, 3
      %p197 = pnand %p195, %p196
      %p198 = pneg %p197
      // Predicated region
      $region33: #{tpu_custom_call.1} parent=5 // pred_check
        _
      $region34: #{tpu_custom_call.1} parent=5 // pred_check_branch
        %200 = sbr.rel (%p197) target = $region36
      $region35: #{tpu_custom_call.1} parent=5 // pred_region
        %s201 = ssub.s32 %s17, 1
        %s202 = sand.u32 %s65, 1
        %s203 = scalar_lea.sflag [#allocation6], %s202
        %s204 = sand.u32 %s65, 1
        %s205 = smul.addr %s204, 8
        %s206 = scalar_lea.vmem [#allocation5], %s205
        // Predicated region
        $region37: #{tpu_custom_call.1} parent=35 // pred_check
          %p207 = pneg %p78
        $region38: #{tpu_custom_call.1} parent=35 // pred_check_branch
          %209 = sbr.rel (%p207) target = $region40
        $region39: #{tpu_custom_call.1} parent=35 // pred_region
          %210 = dma.done %s203, 128
        $region40: #{tpu_custom_call.1} parent=35 // pred_fallthru
          _
        %p211 = pneg %p50
        %p212 = pneg %p47
        %s213 = sand.u32 %s65, 1
        %s214 = scalar_lea.sflag [#allocation6], %s213
        %s215 = sand.u32 %s65, 1
        %s216 = smul.addr %s215, 8
        %s217 = scalar_lea.vmem [#allocation5], %s216
        %p218 = pneg %p78
        %p219 = pneg %p75
        %p220 = pneg %p99
        %p221 = pneg %p96
        %p222 = pneg %p120
        %p223 = pneg %p117
        %p224 = pneg %p146
        %p225 = pneg %p143
        %s226 = sand.u32 %s133, 1
        %s227 = scalar_lea.sflag [#allocation7], %s226
        %s228 = sand.u32 %s133, 1
        %s229 = scalar_lea.vmem [#allocation8], %s228
        %s230 = smul.u32 2, %s27
        %p231 = scmp.eq.s32.totalorder %s27, 0
        // Predicated region
        $region41: #{tpu_custom_call.1} parent=35 // pred_check
          %p232 = pneg %p231
        $region42: #{tpu_custom_call.1} parent=35 // pred_check_branch
          %234 = sbr.rel (%p232) target = $region44
        $region43: #{tpu_custom_call.1} parent=35 // pred_region
          %235 = vst [vmem:[#allocation2] sm:$0xf] 0.0
          %236 = vst [vmem:[#allocation3] sm:$0xf] -inf
        $region44: #{tpu_custom_call.1} parent=35 // pred_fallthru
          _
        %v237 = vld [vmem:[%s206] sm:$0xf]
        %v238 = vld [vmem:[%s206 + $0x4] sm:$0xf]
        %v239 = vadd.f32 %v237, %v238
        %v240 = vmax.f32 %v237, %v238
        %v241 = vld [vmem:[#allocation2] sm:$0xf]
        %v242 = vadd.f32 %v241, %v239
        %243 = vst [vmem:[#allocation2] sm:$0xf] %v242
        %v244 = vld [vmem:[#allocation3] sm:$0xf]
        %v245 = vmax.f32 %v244, %v240
        %246 = vst [vmem:[#allocation3] sm:$0xf] %v245
        // Predicated region
        $region45: #{tpu_custom_call.1} parent=35 // pred_check
          %p247 = pneg %p231
        $region46: #{tpu_custom_call.1} parent=35 // pred_check_branch
          %249 = sbr.rel (%p247) target = $region48
        $region47: #{tpu_custom_call.1} parent=35 // pred_region
          %s250 = sld [smem:[#allocation4]]
          %v251 = vld [vmem:[#allocation2] sm:$0xf]
          %vm252 = vcmask 1043456
          %v253 = vsel %vm252, %v251, 0.0
          %254 = vadd.xlane.f32.xlu0 %v253
          %v255 = vpop.xlane.xlu0 %254
          %v256 = vld [vmem:[#allocation3] sm:$0xf]
          %v257 = vsel %vm252, %v256, -inf
          %258 = vmax.xlane.f32.xlu0 %v257
          %v259 = vpop.xlane.xlu0 %258
          %v260 = vmul.f32 %v255, 0.00390625
          %v261 = vstv %s250
          %v262 = vmul.f32 %v261, %v259
          %s263 = ssub.f32 1.0, %s250
          %v264 = vstv %s263
          %v265 = vmul.f32 %v264, %v260
          %v266 = vadd.f32 %v262, %v265
          %v267 = vld [vmem:[%s2] sm:$0xf]
          %v268 = vld [vmem:[%s3] sm:$0x1]
          %v270 = vlaneseq
          %v271 = vand.u32 %v270, 127
          %v272 = vlaneseq
          %v273 = vshrl.u32 %v272, 7
          %v274 = vsub.s32 %v271, %v273
          %v275 = vrot.slane %v266, %v274
          %vm276 = vcmask 31744
          %v277 = vsel %vm276, %v275, 0
          %v280 = vsel %vm252, %v267, 0
          %282 = vmatprep.subr.mxu0 0.0
          %283 = vmatpush1.msra.mxu0 %v280
          %284 = vmatprep.subr.mxu0 0.0
          %285 = vmatpush1.msra.mxu0 0.0
          %286 = vmatprep.subr.mxu0 0.0
          %287 = vmatpush1.msra.mxu0 0.0
          %288 = vmatprep.subr.mxu0 0.0
          %289 = vmatpush1.msra.mxu0 0.0
          %290 = vmatprep.subr.mxu0 0.0
          %291 = vmatpush1.msra.mxu0 0.0
          %292 = vmatprep.subr.mxu0 0.0
          %293 = vmatpush1.msra.mxu0 0.0
          %294 = vmatprep.subr.mxu0 0.0
          %295 = vmatpush1.msra.mxu0 0.0
          %296 = vmatprep.subr.mxu0 0.0
          %297 = vmatpush1.msra.mxu0 0.0
          %298 = vmatprep.subr.mxu0 0.0
          %299 = vmatpush1.msra.mxu0 0.0
          %300 = vmatprep.subr.mxu0 0.0
          %301 = vmatpush1.msra.mxu0 0.0
          %302 = vmatprep.subr.mxu0 0.0
          %303 = vmatpush1.msra.mxu0 0.0
          %304 = vmatprep.subr.mxu0 0.0
          %305 = vmatpush1.msra.mxu0 0.0
          %306 = vmatprep.subr.mxu0 0.0
          %307 = vmatpush1.msra.mxu0 0.0
          %308 = vmatprep.subr.mxu0 0.0
          %309 = vmatpush1.msra.mxu0 0.0
          %310 = vmatprep.subr.mxu0 0.0
          %311 = vmatpush1.msra.mxu0 0.0
          %312 = vmatprep.subr.mxu0 0.0
          %313 = vmatpush1.msra.mxu0 0.0
          %314 = vmatprep.subr.mxu0 0.0
          %315 = vmatpush1.msra.mxu0 0.0
          %316 = vmatprep.subr.mxu0 0.0
          %317 = vmatpush1.msra.mxu0 0.0
          %318 = vmatprep.subr.mxu0 0.0
          %319 = vmatpush1.msra.mxu0 0.0
          %320 = vmatprep.subr.mxu0 0.0
          %321 = vmatpush1.msra.mxu0 0.0
          %322 = vmatprep.subr.mxu0 0.0
          %323 = vmatpush1.msra.mxu0 0.0
          %324 = vmatprep.subr.mxu0 0.0
          %325 = vmatpush1.msra.mxu0 0.0
          %326 = vmatprep.subr.mxu0 0.0
          %327 = vmatpush1.msra.mxu0 0.0
          %328 = vmatprep.subr.mxu0 0.0
          %329 = vmatpush1.msra.mxu0 0.0
          %330 = vmatprep.subr.mxu0 0.0
          %331 = vmatpush1.msra.mxu0 0.0
          %332 = vmatprep.subr.mxu0 0.0
          %333 = vmatpush1.msra.mxu0 0.0
          %334 = vmatprep.subr.mxu0 0.0
          %335 = vmatpush1.msra.mxu0 0.0
          %336 = vmatprep.subr.mxu0 0.0
          %337 = vmatpush1.msra.mxu0 0.0
          %338 = vmatprep.subr.mxu0 0.0
          %339 = vmatpush1.msra.mxu0 0.0
          %340 = vmatprep.subr.mxu0 0.0
          %341 = vmatpush1.msra.mxu0 0.0
          %342 = vmatprep.subr.mxu0 0.0
          %343 = vmatpush1.msra.mxu0 0.0
          %344 = vmatprep.subr.mxu0 0.0
          %345 = vmatpush1.msra.mxu0 0.0
          %346 = vmatprep.mubr.f32.mxu0 0.0
          %347 = vmatmul.mubr.f32.gmra.mrb[0].mxu0 %v277
          %v348 = vpop.f32.mrb[0].mxu0
          %v349 = vadd.f32 %v268, %v348
          %v350 = vpop.f32.mrb[0].mxu0
          %351 = vdwg.mxu0
          %352 = vst [vmem:[%s229] sm:$0x1] %v349
        $region48: #{tpu_custom_call.1} parent=35 // pred_fallthru
          _
        %s353 = sand.u32 %s133, 1
        %s354 = scalar_lea.sflag [#allocation7], %s353
        %s355 = sand.u32 %s133, 1
        %s356 = scalar_lea.vmem [#allocation8], %s355
        // Predicated region
        $region49: #{tpu_custom_call.1} parent=35 // pred_check
          %p357 = pneg %p143
        $region50: #{tpu_custom_call.1} parent=35 // pred_check_branch
          %359 = sbr.rel (%p357) target = $region52
        $region51: #{tpu_custom_call.1} parent=35 // pred_region
          %s361 = ssub.s32 16, 16
          %362 = vsyncadd %s354, %s361
          %s363 = smul.addr %s26, 16
          %s364 = scalar_lea.hbm %s4, %s363
          %s366 = sshll.u32 %s356, 4
          %s367 = int_to_ptr.vmem [resolvable:$true] %s366
          %369 = dma.vmem_to_hbm [thread:$0]  %s367, 16, %s364, %s354
        $region52: #{tpu_custom_call.1} parent=35 // pred_fallthru
          _
      $region36: #{tpu_custom_call.1} parent=5 // pred_fallthru
        _
      %p370 = scmp.le.s32.totalorder 2, %s17
      // Predicated region
      $region53: #{tpu_custom_call.1} parent=5 // pred_check
        %p371 = pneg %p370
      $region54: #{tpu_custom_call.1} parent=5 // pred_check_branch
        %373 = sbr.rel (%p371) target = $region56
      $region55: #{tpu_custom_call.1} parent=5 // pred_region
        %s374 = ssub.s32 %s17, 2
        // Predicated region
        $region57: #{tpu_custom_call.1} parent=55 // pred_check
          %p375 = pneg %p149
        $region58: #{tpu_custom_call.1} parent=55 // pred_check_branch
          %377 = sbr.rel (%p375) target = $region60
        $region59: #{tpu_custom_call.1} parent=55 // pred_region
          %s378 = sand.u32 %s134, 1
          %s379 = scalar_lea.sflag [#allocation7], %s378
          %s380 = sand.u32 %s134, 1
          %s381 = scalar_lea.vmem [#allocation8], %s380
          %382 = dma.done %s379, 16
        $region60: #{tpu_custom_call.1} parent=55 // pred_fallthru
          _
      $region56: #{tpu_custom_call.1} parent=5 // pred_fallthru
        _
    $region6: #{tpu_custom_call.1} parent=1 // loop_footer
      %s21 = sadd.s32 1, %s17
    $region7: #{tpu_custom_call.1} parent=1 // loop_footer_branch
      %16 = sbr.rel target = $region3
    $region8: #{tpu_custom_call.1} parent=1 // loop_exit
      _
    %383 = vsyncpa [#allocation6], 1
    %s384 = scalar_lea.sflag [#allocation6], 1
    %385 = vsyncpa %s384, 1
    %386 = vsyncpa [#allocation7], 1
    %s387 = scalar_lea.sflag [#allocation7], 1
    %388 = vsyncpa %s387, 1

// kernel: tpu_custom_call.1
$region0: #{tpu_custom_call.1}
  #allocation0 [shape = 'u32[]', space=smem, size = 0x4, offset = 0x4, fixed_abs, tag = 'smem constant byte address 0x4 - core index']
  #allocation1 [shape = 'u32[144,128]{1,0:T(1,128)}', space=vmem, size = 0x12000, scoped, tag = 'internal scratch']
  #allocation2 [shape = 'f32[1,4,128]{2,1,0:T(4,128)}', space=vmem, size = 0x800, scoped, tag = 'scratch operand']
  #allocation3 [shape = 'f32[1,4,128]{2,1,0:T(4,128)}', space=vmem, size = 0x800, scoped, tag = 'scratch operand']
  #allocation4 [shape = 'f32[1]{0:T(128)S(6)}', space=smem, size = 0x200, scoped, tag = 'scoped memory for tpu_custom_call.1']
  %s0 = inlined_call_operand.<no memory space> [shape: f32[1], index: 0, kind: input, shape index: {}]
  %s1 = inlined_call_operand.hbm [shape: f32[2,4,256], index: 1, kind: input, shape index: {}]
  %s2 = inlined_call_operand.vmem [shape: f32[4,128], index: 2, kind: input, shape index: {}]
  %s3 = inlined_call_operand.vmem [shape: f32[1,128], index: 3, kind: input, shape index: {}]
  %s4 = inlined_call_operand.hbm [shape: f32[2,1,128], index: 4, kind: output, shape index: {}]
  %s5 = sld [smem:[#allocation0]]
  $region61: #{tpu_custom_call.1} parent=0
    _
  %s7 = ssub.s32 1, %s5
  %s8 = scalar_select 0, %s7, %s5
  %9 = sst [smem:[#allocation4]] %s0
  $region1: #{tpu_custom_call.1} parent=0
    #allocation5 [shape = 'u8[8192]{0}', space=vmem, size = 0x2000, scoped, tag = 'input window, operand 1']
    #allocation6 [shape = 's32[2]{0}', space=sflag, size = 0x8, scoped, tag = 'scoped memory for tpu_custom_call.1']
    #allocation7 [shape = 's32[2]{0}', space=sflag, size = 0x8, scoped, tag = 'scoped memory for tpu_custom_call.1']
    #allocation8 [shape = 'u8[1024]{0}', space=vmem, size = 0x400, scoped, tag = 'output window, operand 0']
    %10 = vsyncpa [#allocation6], 0
    %s11 = scalar_lea.sflag [#allocation6], 1
    %12 = vsyncpa %s11, 0
    %13 = vsyncpa [#allocation7], 0
    %s14 = scalar_lea.sflag [#allocation7], 1
    %15 = vsyncpa %s14, 0
    loop: start=0, step=1, limit=4
    $region2: #{tpu_custom_call.1} parent=1 // loop_pre_header
      _
    $region3: #{tpu_custom_call.1} parent=1 // loop_header
      %s17 = sphi 0, %s21
      %p18 = scmp.ge.s32.totalorder %s17, 4
      %s24 = sphi 0, %s36
      %s25 = sphi 0, %s32
      %s26 = sphi 0, %s24
      %s27 = sphi 0, %s25
      %s28 = sphi 0, %s26
      %s29 = sphi 0, %s27
      %s37 = sphi 0, %s37
      %s39 = sphi 0, %s37
      %s40 = sphi 0, %s39
      %s54 = sphi 0, %s40
      %s62 = sphi 0, %s64
      %s65 = sphi 0, %s62
      %s66 = sphi 0, %s65
      %s82 = sphi 0, %s66
      %s86 = sphi 0, %s86
      %s88 = sphi 0, %s86
      %s89 = sphi 0, %s88
      %s103 = sphi 0, %s89
      %s107 = sphi 0, %s107
      %s109 = sphi 0, %s107
      %s110 = sphi 0, %s109
      %s124 = sphi 0, %s110
      %s130 = sphi 0, %s132
      %s133 = sphi 0, %s130
      %s134 = sphi 0, %s133
      %s150 = sphi 0, %s134
    $region4: #{tpu_custom_call.1} parent=1 // loop_header_branch
      %20 = sbr.rel (%p18) target = $region8
    $region5: #{tpu_custom_call.1} parent=1 // loop_body
      %s22 = ssub.s32 %s17, 1
      %s23 = ssub.s32 %s17, 2
      %s30 = sadd.s32 1, %s25
      %p31 = scmp.ge.s32.totalorder %s30, 1
      %s32 = scalar_select %p31, 0, %s30
      %s33 = sadd.s32 1, %s24
      %s34 = scalar_select %p31, %s33, %s24
      %p35 = scmp.ge.s32.totalorder %s34, 2
      %s36 = scalar_select %p35, 0, %s34
      %s38 = sadd.s32 %s37, 1
      %p41 = scmp.eq.s32.totalorder %s17, 1
      %p42 = scmp.ne.s32.totalorder %s37, %s39
      %p43 = scmp.eq.s32.totalorder %s17, 0
      %p44 = por %p42, %p43
      %p45 = scmp.ne.s32.totalorder %s37, %s39
      %p46 = scmp.eq.s32.totalorder %s22, 1
      %p47 = por %p45, %p46
      %p48 = scmp.ne.s32.totalorder %s39, %s40
      %p49 = scmp.eq.s32.totalorder %s22, 0
      %p50 = por %p48, %p49
      %p51 = scmp.ne.s32.totalorder %s39, %s40
      %p52 = scmp.eq.s32.totalorder %s23, 1
      %p53 = por %p51, %p52
      %p55 = scmp.ne.s32.totalorder %s40, %s54
      %p56 = scmp.eq.s32.totalorder %s23, 0
      %p57 = por %p55, %p56
      %s58 = ssub.s32 %s24, %s36
      %s59 = ssub.s32 %s25, %s32
      %s60 = sor.u32 %s58, %s59
      %p61 = scmp.eq.s32.totalorder %s60, 0
      %s63 = sadd.s32 %s62, 1
      %s64 = scalar_select %p61, %s62, %s63
      %p67 = pneg %p61
      %p68 = scmp.eq.s32.totalorder %s17, 1
      %p69 = por %p67, %p68
      %p70 = scmp.ne.s32.totalorder %s62, %s65
      %p71 = scmp.eq.s32.totalorder %s17, 0
      %p72 = por %p70, %p71
      %p73 = scmp.ne.s32.totalorder %s62, %s65
      %p74 = scmp.eq.s32.totalorder %s22, 1
      %p75 = por %p73, %p74
      %p76 = scmp.ne.s32.totalorder %s65, %s66
      %p77 = scmp.eq.s32.totalorder %s22, 0
      %p78 = por %p76, %p77
      %p79 = scmp.ne.s32.totalorder %s65, %s66
      %p80 = scmp.eq.s32.totalorder %s23, 1
      %p81 = por %p79, %p80
      %p83 = scmp.ne.s32.totalorder %s66, %s82
      %p84 = scmp.eq.s32.totalorder %s23, 0
      %p85 = por %p83, %p84
      %s87 = sadd.s32 %s86, 1
      %p90 = scmp.eq.s32.totalorder %s17, 1
      %p91 = scmp.ne.s32.totalorder %s86, %s88
      %p92 = scmp.eq.s32.totalorder %s17, 0
      %p93 = por %p91, %p92
      %p94 = scmp.ne.s32.totalorder %s86, %s88
      %p95 = scmp.eq.s32.totalorder %s22, 1
      %p96 = por %p94, %p95
      %p97 = scmp.ne.s32.totalorder %s88, %s89
      %p98 = scmp.eq.s32.totalorder %s22, 0
      %p99 = por %p97, %p98
      %p100 = scmp.ne.s32.totalorder %s88, %s89
      %p101 = scmp.eq.s32.totalorder %s23, 1
      %p102 = por %p100, %p101
      %p104 = scmp.ne.s32.totalorder %s89, %s103
      %p105 = scmp.eq.s32.totalorder %s23, 0
      %p106 = por %p104, %p105
      %s108 = sadd.s32 %s107, 1
      %p111 = scmp.eq.s32.totalorder %s17, 1
      %p112 = scmp.ne.s32.totalorder %s107, %s109
      %p113 = scmp.eq.s32.totalorder %s17, 0
      %p114 = por %p112, %p113
      %p115 = scmp.ne.s32.totalorder %s107, %s109
      %p116 = scmp.eq.s32.totalorder %s22, 1
      %p117 = por %p115, %p116
      %p118 = scmp.ne.s32.totalorder %s109, %s110
      %p119 = scmp.eq.s32.totalorder %s22, 0
      %p120 = por %p118, %p119
      %p121 = scmp.ne.s32.totalorder %s109, %s110
      %p122 = scmp.eq.s32.totalorder %s23, 1
      %p123 = por %p121, %p122
      %p125 = scmp.ne.s32.totalorder %s110, %s124
      %p126 = scmp.eq.s32.totalorder %s23, 0
      %p127 = por %p125, %p126
      %s128 = ssub.s32 %s24, %s36
      %p129 = scmp.eq.s32.totalorder %s128, 0
      %s131 = sadd.s32 %s130, 1
      %s132 = scalar_select %p129, %s130, %s131
      %p135 = pneg %p129
      %p136 = scmp.eq.s32.totalorder %s17, 1
      %p137 = por %p135, %p136
      %p138 = scmp.ne.s32.totalorder %s130, %s133
      %p139 = scmp.eq.s32.totalorder %s17, 0
      %p140 = por %p138, %p139
      %p141 = scmp.ne.s32.totalorder %s130, %s133
      %p142 = scmp.eq.s32.totalorder %s22, 1
      %p143 = por %p141, %p142
      %p144 = scmp.ne.s32.totalorder %s133, %s134
      %p145 = scmp.eq.s32.totalorder %s22, 0
      %p146 = por %p144, %p145
      %p147 = scmp.ne.s32.totalorder %s133, %s134
      %p148 = scmp.eq.s32.totalorder %s23, 1
      %p149 = por %p147, %p148
      %p151 = scmp.ne.s32.totalorder %s134, %s150
      %p152 = scmp.eq.s32.totalorder %s23, 0
      %p153 = por %p151, %p152
      %p154 = scmp.le.s32.totalorder 1, %s17
      %p155 = scmp.lt.s32.totalorder %s17, 3
      %p156 = pnand %p154, %p155
      %p157 = pneg %p156
      // Predicated region
      $region9: #{tpu_custom_call.1} parent=5 // pred_check
        _
      $region10: #{tpu_custom_call.1} parent=5 // pred_check_branch
        %159 = sbr.rel (%p156) target = $region12
      $region11: #{tpu_custom_call.1} parent=5 // pred_region
        %s160 = ssub.s32 %s17, 1
        // Predicated region
        $region13: #{tpu_custom_call.1} parent=11 // pred_check
          %p161 = pneg %p50
        $region14: #{tpu_custom_call.1} parent=11 // pred_check_branch
          %163 = sbr.rel (%p161) target = $region16
        $region15: #{tpu_custom_call.1} parent=11 // pred_region
          _
        $region16: #{tpu_custom_call.1} parent=11 // pred_fallthru
          _
        // Predicated region
        $region17: #{tpu_custom_call.1} parent=11 // pred_check
          %p164 = pneg %p99
        $region18: #{tpu_custom_call.1} parent=11 // pred_check_branch
          %166 = sbr.rel (%p164) target = $region20
        $region19: #{tpu_custom_call.1} parent=11 // pred_region
          _
        $region20: #{tpu_custom_call.1} parent=11 // pred_fallthru
          _
        // Predicated region
        $region21: #{tpu_custom_call.1} parent=11 // pred_check
          %p167 = pneg %p120
        $region22: #{tpu_custom_call.1} parent=11 // pred_check_branch
          %169 = sbr.rel (%p167) target = $region24
        $region23: #{tpu_custom_call.1} parent=11 // pred_region
          _
        $region24: #{tpu_custom_call.1} parent=11 // pred_fallthru
          _
      $region12: #{tpu_custom_call.1} parent=5 // pred_fallthru
        _
      %p170 = scmp.lt.s32.totalorder %s17, 2
      // Predicated region
      $region25: #{tpu_custom_call.1} parent=5 // pred_check
        %p171 = pneg %p170
      $region26: #{tpu_custom_call.1} parent=5 // pred_check_branch
        %173 = sbr.rel (%p171) target = $region28
      $region27: #{tpu_custom_call.1} parent=5 // pred_region
        // Predicated region
        $region29: #{tpu_custom_call.1} parent=27 // pred_check
          %p174 = pneg %p72
        $region30: #{tpu_custom_call.1} parent=27 // pred_check_branch
          %176 = sbr.rel (%p174) target = $region32
        $region31: #{tpu_custom_call.1} parent=27 // pred_region
          %s177 = sand.u32 %s62, 1
          %s178 = scalar_lea.sflag [#allocation6], %s177
          %s179 = sand.u32 %s62, 1
          %s180 = smul.addr %s179, 8
          %s181 = scalar_lea.vmem [#allocation5], %s180
          %s182 = smul.u32 2, %s25
          %s184 = ssub.s32 128, 128
          %185 = vsyncadd %s178, %s184
          %s186 = smul.addr %s24, 2
          %s187 = sadd.s32 %s182, %s186
          %s188 = smul.addr %s187, 64
          %s189 = scalar_lea.hbm %s1, %s188
          %s191 = sshll.u32 %s181, 4
          %s192 = int_to_ptr.vmem [resolvable:$true] %s191
          %194 = dma.hbm_to_vmem [thread:$0]  %s189, 128, %s192, %s178
        $region32: #{tpu_custom_call.1} parent=27 // pred_fallthru
          _
      $region28: #{tpu_custom_call.1} parent=5 // pred_fallthru
        _
      %p195 = scmp.le.s32.totalorder 1, %s17
      %p196 = scmp.lt.s32.totalorder %s17, 3
      %p197 = pnand %p195, %p196
      %p198 = pneg %p197
      // Predicated region
      $region33: #{tpu_custom_call.1} parent=5 // pred_check
        _
      $region34: #{tpu_custom_call.1} parent=5 // pred_check_branch
        %200 = sbr.rel (%p197) target = $region36
      $region35: #{tpu_custom_call.1} parent=5 // pred_region
        %s201 = ssub.s32 %s17, 1
        %s202 = sand.u32 %s65, 1
        %s203 = scalar_lea.sflag [#allocation6], %s202
        %s204 = sand.u32 %s65, 1
        %s205 = smul.addr %s204, 8
        %s206 = scalar_lea.vmem [#allocation5], %s205
        // Predicated region
        $region37: #{tpu_custom_call.1} parent=35 // pred_check
          %p207 = pneg %p78
        $region38: #{tpu_custom_call.1} parent=35 // pred_check_branch
          %209 = sbr.rel (%p207) target = $region40
        $region39: #{tpu_custom_call.1} parent=35 // pred_region
          %210 = dma.done %s203, 128
        $region40: #{tpu_custom_call.1} parent=35 // pred_fallthru
          _
        %p211 = pneg %p50
        %p212 = pneg %p47
        %s213 = sand.u32 %s65, 1
        %s214 = scalar_lea.sflag [#allocation6], %s213
        %s215 = sand.u32 %s65, 1
        %s216 = smul.addr %s215, 8
        %s217 = scalar_lea.vmem [#allocation5], %s216
        %p218 = pneg %p78
        %p219 = pneg %p75
        %p220 = pneg %p99
        %p221 = pneg %p96
        %p222 = pneg %p120
        %p223 = pneg %p117
        %p224 = pneg %p146
        %p225 = pneg %p143
        %s226 = sand.u32 %s133, 1
        %s227 = scalar_lea.sflag [#allocation7], %s226
        %s228 = sand.u32 %s133, 1
        %s229 = scalar_lea.vmem [#allocation8], %s228
        %s230 = smul.u32 2, %s27
        %p231 = scmp.eq.s32.totalorder %s27, 0
        // Predicated region
        $region41: #{tpu_custom_call.1} parent=35 // pred_check
          %p232 = pneg %p231
        $region42: #{tpu_custom_call.1} parent=35 // pred_check_branch
          %234 = sbr.rel (%p232) target = $region44
        $region43: #{tpu_custom_call.1} parent=35 // pred_region
          %235 = vst [vmem:[#allocation2] sm:$0xf] 0.0
          %236 = vst [vmem:[#allocation3] sm:$0xf] -inf
        $region44: #{tpu_custom_call.1} parent=35 // pred_fallthru
          _
        %v237 = vld [vmem:[%s206] sm:$0xf]
        %v238 = vld [vmem:[%s206 + $0x4] sm:$0xf]
        %v239 = vadd.f32 %v237, %v238
        %v240 = vmax.f32 %v237, %v238
        %v241 = vld [vmem:[#allocation2] sm:$0xf]
        %v242 = vadd.f32 %v241, %v239
        %243 = vst [vmem:[#allocation2] sm:$0xf] %v242
        %v244 = vld [vmem:[#allocation3] sm:$0xf]
        %v245 = vmax.f32 %v244, %v240
        %246 = vst [vmem:[#allocation3] sm:$0xf] %v245
        // Predicated region
        $region45: #{tpu_custom_call.1} parent=35 // pred_check
          %p247 = pneg %p231
        $region46: #{tpu_custom_call.1} parent=35 // pred_check_branch
          %249 = sbr.rel (%p247) target = $region48
        $region47: #{tpu_custom_call.1} parent=35 // pred_region
          %s250 = sld [smem:[#allocation4]]
          %v251 = vld [vmem:[#allocation2] sm:$0xf]
          %vm252 = vcmask 1043456
          %v253 = vsel %vm252, %v251, 0.0
          %254 = vadd.xlane.f32.xlu0 %v253
          %v255 = vpop.xlane.xlu0 %254
          %v256 = vld [vmem:[#allocation3] sm:$0xf]
          %v257 = vsel %vm252, %v256, -inf
          %258 = vmax.xlane.f32.xlu0 %v257
          %v259 = vpop.xlane.xlu0 %258
          %v260 = vmul.f32 %v255, 0.00390625
          %v261 = vstv %s250
          %v262 = vmul.f32 %v261, %v259
          %s263 = ssub.f32 1.0, %s250
          %v264 = vstv %s263
          %v265 = vmul.f32 %v264, %v260
          %v266 = vadd.f32 %v262, %v265
          %v267 = vld [vmem:[%s2] sm:$0xf]
          %v268 = vld [vmem:[%s3] sm:$0x1]
          %v270 = vlaneseq
          %v271 = vand.u32 %v270, 127
          %v272 = vlaneseq
          %v273 = vshrl.u32 %v272, 7
          %v274 = vsub.s32 %v271, %v273
          %v275 = vrot.slane %v266, %v274
          %vm276 = vcmask 31744
          %v277 = vsel %vm276, %v275, 0
          %v280 = vsel %vm252, %v267, 0
          %282 = vmatprep.subr.mxu0 0.0
          %283 = vmatpush1.msra.mxu0 %v280
          %284 = vmatprep.subr.mxu0 0.0
          %285 = vmatpush1.msra.mxu0 0.0
          %286 = vmatprep.subr.mxu0 0.0
          %287 = vmatpush1.msra.mxu0 0.0
          %288 = vmatprep.subr.mxu0 0.0
          %289 = vmatpush1.msra.mxu0 0.0
          %290 = vmatprep.subr.mxu0 0.0
          %291 = vmatpush1.msra.mxu0 0.0
          %292 = vmatprep.subr.mxu0 0.0
          %293 = vmatpush1.msra.mxu0 0.0
          %294 = vmatprep.subr.mxu0 0.0
          %295 = vmatpush1.msra.mxu0 0.0
          %296 = vmatprep.subr.mxu0 0.0
          %297 = vmatpush1.msra.mxu0 0.0
          %298 = vmatprep.subr.mxu0 0.0
          %299 = vmatpush1.msra.mxu0 0.0
          %300 = vmatprep.subr.mxu0 0.0
          %301 = vmatpush1.msra.mxu0 0.0
          %302 = vmatprep.subr.mxu0 0.0
          %303 = vmatpush1.msra.mxu0 0.0
          %304 = vmatprep.subr.mxu0 0.0
          %305 = vmatpush1.msra.mxu0 0.0
          %306 = vmatprep.subr.mxu0 0.0
          %307 = vmatpush1.msra.mxu0 0.0
          %308 = vmatprep.subr.mxu0 0.0
          %309 = vmatpush1.msra.mxu0 0.0
          %310 = vmatprep.subr.mxu0 0.0
          %311 = vmatpush1.msra.mxu0 0.0
          %312 = vmatprep.subr.mxu0 0.0
          %313 = vmatpush1.msra.mxu0 0.0
          %314 = vmatprep.subr.mxu0 0.0
          %315 = vmatpush1.msra.mxu0 0.0
          %316 = vmatprep.subr.mxu0 0.0
          %317 = vmatpush1.msra.mxu0 0.0
          %318 = vmatprep.subr.mxu0 0.0
          %319 = vmatpush1.msra.mxu0 0.0
          %320 = vmatprep.subr.mxu0 0.0
          %321 = vmatpush1.msra.mxu0 0.0
          %322 = vmatprep.subr.mxu0 0.0
          %323 = vmatpush1.msra.mxu0 0.0
          %324 = vmatprep.subr.mxu0 0.0
          %325 = vmatpush1.msra.mxu0 0.0
          %326 = vmatprep.subr.mxu0 0.0
          %327 = vmatpush1.msra.mxu0 0.0
          %328 = vmatprep.subr.mxu0 0.0
          %329 = vmatpush1.msra.mxu0 0.0
          %330 = vmatprep.subr.mxu0 0.0
          %331 = vmatpush1.msra.mxu0 0.0
          %332 = vmatprep.subr.mxu0 0.0
          %333 = vmatpush1.msra.mxu0 0.0
          %334 = vmatprep.subr.mxu0 0.0
          %335 = vmatpush1.msra.mxu0 0.0
          %336 = vmatprep.subr.mxu0 0.0
          %337 = vmatpush1.msra.mxu0 0.0
          %338 = vmatprep.subr.mxu0 0.0
          %339 = vmatpush1.msra.mxu0 0.0
          %340 = vmatprep.subr.mxu0 0.0
          %341 = vmatpush1.msra.mxu0 0.0
          %342 = vmatprep.subr.mxu0 0.0
          %343 = vmatpush1.msra.mxu0 0.0
          %344 = vmatprep.subr.mxu0 0.0
          %345 = vmatpush1.msra.mxu0 0.0
          %346 = vmatprep.mubr.f32.mxu0 0.0
          %347 = vmatmul.mubr.f32.gmra.mrb[0].mxu0 %v277
          %v348 = vpop.f32.mrb[0].mxu0
          %v349 = vadd.f32 %v268, %v348
          %v350 = vpop.f32.mrb[0].mxu0
          %351 = vdwg.mxu0
          %352 = vst [vmem:[%s229] sm:$0x1] %v349
        $region48: #{tpu_custom_call.1} parent=35 // pred_fallthru
          _
        %s353 = sand.u32 %s133, 1
        %s354 = scalar_lea.sflag [#allocation7], %s353
        %s355 = sand.u32 %s133, 1
        %s356 = scalar_lea.vmem [#allocation8], %s355
        // Predicated region
        $region49: #{tpu_custom_call.1} parent=35 // pred_check
          %p357 = pneg %p143
        $region50: #{tpu_custom_call.1} parent=35 // pred_check_branch
          %359 = sbr.rel (%p357) target = $region52
        $region51: #{tpu_custom_call.1} parent=35 // pred_region
          %s361 = ssub.s32 16, 16
          %362 = vsyncadd %s354, %s361
          %s363 = smul.addr %s26, 16
          %s364 = scalar_lea.hbm %s4, %s363
          %s366 = sshll.u32 %s356, 4
          %s367 = int_to_ptr.vmem [resolvable:$true] %s366
          %369 = dma.vmem_to_hbm [thread:$0]  %s367, 16, %s364, %s354
        $region52: #{tpu_custom_call.1} parent=35 // pred_fallthru
          _
      $region36: #{tpu_custom_call.1} parent=5 // pred_fallthru
        _
      %p370 = scmp.le.s32.totalorder 2, %s17
      // Predicated region
      $region53: #{tpu_custom_call.1} parent=5 // pred_check
        %p371 = pneg %p370
      $region54: #{tpu_custom_call.1} parent=5 // pred_check_branch
        %373 = sbr.rel (%p371) target = $region56
      $region55: #{tpu_custom_call.1} parent=5 // pred_region
        %s374 = ssub.s32 %s17, 2
        // Predicated region
        $region57: #{tpu_custom_call.1} parent=55 // pred_check
          %p375 = pneg %p149
        $region58: #{tpu_custom_call.1} parent=55 // pred_check_branch
          %377 = sbr.rel (%p375) target = $region60
        $region59: #{tpu_custom_call.1} parent=55 // pred_region
          %s378 = sand.u32 %s134, 1
          %s379 = scalar_lea.sflag [#allocation7], %s378
          %s380 = sand.u32 %s134, 1
          %s381 = scalar_lea.vmem [#allocation8], %s380
          %382 = dma.done %s379, 16
        $region60: #{tpu_custom_call.1} parent=55 // pred_fallthru
          _
      $region56: #{tpu_custom_call.1} parent=5 // pred_fallthru
        _
    $region6: #{tpu_custom_call.1} parent=1 // loop_footer
      %s21 = sadd.s32 1, %s17
    $region7: #{tpu_custom_call.1} parent=1 // loop_footer_branch
      %16 = sbr.rel target = $region3
    $region8: #{tpu_custom_call.1} parent=1 // loop_exit
      _
    %383 = vsyncpa [#allocation6], 1
    %s384 = scalar_lea.sflag [#allocation6], 1
    %385 = vsyncpa %s384, 1
    %386 = vsyncpa [#allocation7], 1
    %s387 = scalar_lea.sflag [#allocation7], 1
    %388 = vsyncpa %s387, 1

</llo_original>
